<compile_context>
chip_gen: v6e
topology: v6e:2x2x1
jax: 0.10.0
libtpu: 0.0.40
codegen_flags: <defaults>
</compile_context>

<pallas_src>
from functools import partial

import jax
import jax.numpy as jnp
from jax.experimental import pallas as pl
from jax.experimental.pallas import tpu as pltpu

SIGMA_MIN = 0.1
OFFSET = 1e-5


def cfm_loss_kernel(t_ref, x1_ref, noise_ref, mu_ref, mask_ref,
                    w_ref, bias_ref,
                    x_out_ref, sse_ref, *, sigma_min):
    b = pl.program_id(0)          # batch          (parallel)
    jt = pl.program_id(1)         # time tile      (arbitrary: SSE accumulation)

    t = t_ref[b]                  # scalar (SMEM)
    x1 = x1_ref[...]              # (C, tT) f32
    noise = noise_ref[...]        # (C, tT) f32
    mu = mu_ref[...]              # (C, tT) f32
    mask = mask_ref[...]          # (1, tT) f32

    # --- conditional flow-matching sample + target (VPU, f32) ---
    #   x  = t*x1 + sigma_t*noise
    #   ut = (sigma_min-1)/sigma_t * (x - t*x1) + x1  ==  x1 + (sigma_min-1)*noise
    sigma_t = 1.0 - (1.0 - sigma_min) * t
    x = t * x1 + sigma_t * noise
    ut = x1 + (sigma_min - 1.0) * noise

    # --- stand-in estimator: single fused bf16 MXU matmul over [x; mu] ---
    xm = jnp.concatenate([x, mu], axis=0).astype(jnp.bfloat16)       # (2C, tT)
    v = (jnp.dot(w_ref[...], xm, preferred_element_type=jnp.float32)
         + bias_ref[...]) * mask                                      # (C, tT) f32

    # --- outputs ---
    x_out_ref[...] = x            # lane-dense (C, tT) tile, written every step

    diff = ut - v
    @pl.when(jt == 0)
    def _():
        sse_ref[...] = jnp.zeros_like(sse_ref)
    sse_ref[...] += jnp.sum(diff * diff, keepdims=True)   # (1, 1) per-batch SSE


def _pick_tile_t(T, max_tile=2048):
    """Largest multiple of 128 that divides T and is <= max_tile (v7x-safe)."""
    tile = min(T, max_tile)
    tile -= tile % 128
    while tile > 128 and T % tile:
        tile -= 128
    return max(tile, 128)


def fm_forward(x1, mask, mu, t, noise, wx, wmu, bias,
               sigma_min=SIGMA_MIN, tile_t=None):
    """Returns (mse_loss, x) exactly as FM.loss_t (with the stand-in estimator)."""
    B, C, T = x1.shape
    assert T % 128 == 0, "T must be a multiple of 128 (lane axis)"
    if tile_t is None:
        tile_t = _pick_tile_t(T)
    assert T % tile_t == 0 and tile_t % 128 == 0
    nT = T // tile_t

    # Fused estimator weight: W = [wx | wmu], pre-cast to bf16 (MXU-native path).
    w = jnp.concatenate([wx, wmu], axis=1).astype(jnp.bfloat16)       # (C, 2C)

    kernel = partial(cfm_loss_kernel, sigma_min=sigma_min)

    x_out, sse = pl.pallas_call(
        kernel,
        out_shape=(
            jax.ShapeDtypeStruct((B, C, T), jnp.float32),
            jax.ShapeDtypeStruct((B, 1, 1), jnp.float32),
        ),
        grid=(B, nT),
        in_specs=[
            pl.BlockSpec(memory_space=pltpu.MemorySpace.SMEM),                 # t (B,)
            pl.BlockSpec((pl.Squeezed(), C, tile_t), lambda b, j: (b, 0, j)),  # x1
            pl.BlockSpec((pl.Squeezed(), C, tile_t), lambda b, j: (b, 0, j)),  # noise
            pl.BlockSpec((pl.Squeezed(), C, tile_t), lambda b, j: (b, 0, j)),  # mu
            pl.BlockSpec((pl.Squeezed(), 1, tile_t), lambda b, j: (b, 0, j)),  # mask
            pl.BlockSpec((C, 2 * C), lambda b, j: (0, 0)),                     # W (bf16)
            pl.BlockSpec((C, 1), lambda b, j: (0, 0)),                         # bias
        ],
        out_specs=(
            pl.BlockSpec((pl.Squeezed(), C, tile_t), lambda b, j: (b, 0, j)),  # x
            pl.BlockSpec((pl.Squeezed(), 1, 1), lambda b, j: (b, 0, 0)),       # SSE (resident over j)
        ),
        compiler_params=pltpu.CompilerParams(
            dimension_semantics=("parallel", "arbitrary"),
            vmem_limit_bytes=48 * 1024 * 1024),
    )(t, x1, noise, mu, mask, w, bias)

    mse_loss = jnp.sum(sse) / (B * C * T)   # MSELoss(reduction='mean')
    return mse_loss, x_out


def fm_forward_reference(x1, mask, mu, t, noise, wx, wmu, bias,
                         sigma_min=SIGMA_MIN):
    """Pure-JAX reference of the same math (original un-simplified ut formula;
    stand-in estimator defined with bf16 matmul operands + f32 accumulation)."""
    t3 = t[:, None, None]
    mu_t = t3 * x1
    sigma_t = 1.0 - (1.0 - sigma_min) * t3
    x = mu_t + sigma_t * noise
    ut = (sigma_min - 1.0) / sigma_t * (x - mu_t) + x1
    w = jnp.concatenate([wx, wmu], axis=1).astype(jnp.bfloat16)       # (C, 2C)
    xm = jnp.concatenate([x, mu], axis=1).astype(jnp.bfloat16)        # (B, 2C, T)
    v = (jnp.einsum('ok,bkt->bot', w, xm,
                    preferred_element_type=jnp.float32) + bias[None]) * mask
    mse = jnp.mean((ut - v) ** 2)
    return mse, x


if __name__ == "__main__":
    # batch, n_feats (= in_channels = out_channel), frames
    B, C, T = 2, 8, 512
    TILE_T = 256     # exercises the T-tile / SSE-accumulation axis (nT = 2)

    key = jax.random.PRNGKey(0)
    k_x1, k_mu, k_t, k_noise, k_wx, k_wmu = jax.random.split(key, 6)

    # Inputs (as FM.forward receives them)
    x1 = jax.random.normal(k_x1, (B, C, T), dtype=jnp.float32)
    mu = jax.random.normal(k_mu, (B, C, T), dtype=jnp.float32)
    lengths = jnp.array([T, 3 * T // 4], dtype=jnp.int32)
    mask = (jnp.arange(T)[None, None, :] < lengths[:, None, None]).astype(jnp.float32)

    # In-forward randomness (torch.rand / torch.randn_like), drawn in glue JAX
    t = jnp.clip(jax.random.uniform(k_t, (B,), dtype=jnp.float32),
                 OFFSET, 1.0 - OFFSET)
    noise = jax.random.normal(k_noise, (B, C, T), dtype=jnp.float32)

    # Deterministic stand-in estimator parameters
    wx = 0.1 * jax.random.normal(k_wx, (C, C), dtype=jnp.float32)
    wmu = 0.1 * jax.random.normal(k_wmu, (C, C), dtype=jnp.float32)
    bias = 0.01 * jnp.arange(C, dtype=jnp.float32).reshape(C, 1)

    mse, x = fm_forward(x1, mask, mu, t, noise, wx, wmu, bias, tile_t=TILE_T)
    jax.block_until_ready((mse, x))

    mse_ref, x_ref = fm_forward_reference(x1, mask, mu, t, noise, wx, wmu, bias)
    assert jnp.allclose(x, x_ref, rtol=1e-5, atol=1e-5), "x mismatch"
    assert jnp.allclose(mse, mse_ref, rtol=1e-4, atol=1e-5), "mse mismatch"

    print("KERNEL_OK")
</pallas_src>

<mosaic_0001>
module attributes {stable_mosaic.version = 11 : i64} {
  func.func @cfm_loss_kernel(%arg0: i32, %arg1: i32, %arg2: memref<2xf32, #tpu.memory_space<smem>>, %arg3: memref<1x8x256xf32, #tpu.memory_space<vmem>>, %arg4: memref<1x8x256xf32, #tpu.memory_space<vmem>>, %arg5: memref<1x8x256xf32, #tpu.memory_space<vmem>>, %arg6: memref<1x1x256xf32, #tpu.memory_space<vmem>>, %arg7: memref<8x16xbf16, #tpu.memory_space<vmem>>, %arg8: memref<8x1xf32, #tpu.memory_space<vmem>>, %arg9: memref<1x8x256xf32, #tpu.memory_space<vmem>>, %arg10: memref<1x1x1xf32, #tpu.memory_space<vmem>>) attributes {dimension_semantics = [#tpu.dimension_semantics<parallel>, #tpu.dimension_semantics<arbitrary>], iteration_bounds = array<i64: 2, 2>, scalar_prefetch = 0 : i64, scratch_operands = 0 : i64, tpu.core_type = #tpu.core_type<tc>, window_params = [{transform_indices = @transform_0, window_bounds = array<i64: 2>}, {transform_indices = @transform_1, window_bounds = array<i64: 1, 8, 256>}, {transform_indices = @transform_2, window_bounds = array<i64: 1, 8, 256>}, {transform_indices = @transform_3, window_bounds = array<i64: 1, 8, 256>}, {transform_indices = @transform_4, window_bounds = array<i64: 1, 1, 256>}, {pipeline_mode = #tpu.pipeline_mode<synchronous>, transform_indices = @transform_5, window_bounds = array<i64: 8, 16>}, {pipeline_mode = #tpu.pipeline_mode<synchronous>, transform_indices = @transform_6, window_bounds = array<i64: 8, 1>}, {transform_indices = @transform_7, window_bounds = array<i64: 1, 8, 256>}, {transform_indices = @transform_8, window_bounds = array<i64: 1, 1, 1>}]} {
    %0 = arith.index_cast %arg0 : i32 to index
    %1 = memref.load %arg2[%0] : memref<2xf32, #tpu.memory_space<smem>>
    %c0 = arith.constant 0 : index
    %c0_0 = arith.constant 0 : index
    %c0_1 = arith.constant 0 : index
    %2 = vector.load %arg3[%c0, %c0_0, %c0_1] : memref<1x8x256xf32, #tpu.memory_space<vmem>>, vector<1x8x256xf32>
    %3 = vector.shape_cast %2 : vector<1x8x256xf32> to vector<8x256xf32>
    %c0_2 = arith.constant 0 : index
    %c0_3 = arith.constant 0 : index
    %c0_4 = arith.constant 0 : index
    %4 = vector.load %arg4[%c0_2, %c0_3, %c0_4] : memref<1x8x256xf32, #tpu.memory_space<vmem>>, vector<1x8x256xf32>
    %5 = vector.shape_cast %4 : vector<1x8x256xf32> to vector<8x256xf32>
    %c0_5 = arith.constant 0 : index
    %c0_6 = arith.constant 0 : index
    %c0_7 = arith.constant 0 : index
    %6 = vector.load %arg5[%c0_5, %c0_6, %c0_7] : memref<1x8x256xf32, #tpu.memory_space<vmem>>, vector<1x8x256xf32>
    %7 = vector.shape_cast %6 : vector<1x8x256xf32> to vector<8x256xf32>
    %c0_8 = arith.constant 0 : index
    %c0_9 = arith.constant 0 : index
    %c0_10 = arith.constant 0 : index
    %8 = vector.load %arg6[%c0_8, %c0_9, %c0_10] : memref<1x1x256xf32, #tpu.memory_space<vmem>>, vector<1x1x256xf32>
    %9 = vector.shape_cast %8 : vector<1x1x256xf32> to vector<1x256xf32>
    %cst = arith.constant 0.899999976 : f32
    %10 = arith.mulf %cst, %1 : f32
    %cst_11 = arith.constant 1.000000e+00 : f32
    %11 = arith.subf %cst_11, %10 : f32
    %12 = vector.broadcast %1 : f32 to vector<8x256xf32>
    %13 = arith.mulf %12, %3 : vector<8x256xf32>
    %14 = vector.broadcast %11 : f32 to vector<8x256xf32>
    %15 = arith.mulf %14, %5 : vector<8x256xf32>
    %16 = arith.addf %13, %15 : vector<8x256xf32>
    %cst_12 = arith.constant -0.899999976 : f32
    %17 = vector.broadcast %cst_12 : f32 to vector<8x256xf32>
    %18 = arith.mulf %17, %5 : vector<8x256xf32>
    %19 = arith.addf %3, %18 : vector<8x256xf32>
    %20 = tpu.concatenate %16, %7 in 0 : vector<8x256xf32>, vector<8x256xf32> -> vector<16x256xf32>
    %21 = arith.truncf %20 : vector<16x256xf32> to vector<16x256xbf16>
    %c0_13 = arith.constant 0 : index
    %c0_14 = arith.constant 0 : index
    %22 = vector.load %arg7[%c0_13, %c0_14] : memref<8x16xbf16, #tpu.memory_space<vmem>>, vector<8x16xbf16>
    %cst_15 = arith.constant dense<0.000000e+00> : vector<8x256xf32>
    %23 = tpu.matmul %22, %21, %cst_15 {dimension_numbers = #tpu.dot_dimension_numbers<[1], [0], [0], [1], [0, 0, 1, 1], [], []>} : vector<8x16xbf16>, vector<16x256xbf16>, vector<8x256xf32> -> vector<8x256xf32>
    %c0_16 = arith.constant 0 : index
    %c0_17 = arith.constant 0 : index
    %24 = vector.load %arg8[%c0_16, %c0_17] : memref<8x1xf32, #tpu.memory_space<vmem>>, vector<8x1xf32>
    %25 = vector.broadcast %24 : vector<8x1xf32> to vector<8x256xf32>
    %26 = arith.addf %23, %25 : vector<8x256xf32>
    %27 = vector.broadcast %9 : vector<1x256xf32> to vector<8x256xf32>
    %28 = arith.mulf %26, %27 : vector<8x256xf32>
    %c0_18 = arith.constant 0 : index
    %c0_19 = arith.constant 0 : index
    %c0_20 = arith.constant 0 : index
    %29 = vector.load %arg9[%c0_18, %c0_19, %c0_20] : memref<1x8x256xf32, #tpu.memory_space<vmem>>, vector<1x8x256xf32>
    %30 = vector.shape_cast %29 : vector<1x8x256xf32> to vector<8x256xf32>
    %31 = vector.shape_cast %16 : vector<8x256xf32> to vector<1x8x256xf32>
    tpu.vector_store %arg9[%c0_18, %c0_19, %c0_20], %31 {strides = array<i32>} : memref<1x8x256xf32, #tpu.memory_space<vmem>>, vector<1x8x256xf32>,
    %32 = arith.subf %19, %28 : vector<8x256xf32>
    %c0_i32 = arith.constant 0 : i32
    %33 = arith.cmpi eq, %arg1, %c0_i32 : i32
    %34 = arith.extui %33 : i1 to i32
    %c0_i32_21 = arith.constant 0 : i32
    %35 = arith.cmpi ne, %34, %c0_i32_21 : i32
    scf.if %35 {
      %cst_29 = arith.constant 0.000000e+00 : f32
      %48 = vector.broadcast %cst_29 : f32 to vector<1x1xf32>
      %c0_30 = arith.constant 0 : index
      %c0_31 = arith.constant 0 : index
      %c0_32 = arith.constant 0 : index
      %49 = vector.load %arg10[%c0_30, %c0_31, %c0_32] : memref<1x1x1xf32, #tpu.memory_space<vmem>>, vector<1x1x1xf32>
      %50 = vector.shape_cast %49 : vector<1x1x1xf32> to vector<1x1xf32>
      %51 = vector.shape_cast %48 : vector<1x1xf32> to vector<1x1x1xf32>
      tpu.vector_store %arg10[%c0_30, %c0_31, %c0_32], %51 {strides = array<i32>} : memref<1x1x1xf32, #tpu.memory_space<vmem>>, vector<1x1x1xf32>,
    } else {
    }
    %c0_22 = arith.constant 0 : index
    %c0_23 = arith.constant 0 : index
    %c0_24 = arith.constant 0 : index
    %36 = vector.load %arg10[%c0_22, %c0_23, %c0_24] : memref<1x1x1xf32, #tpu.memory_space<vmem>>, vector<1x1x1xf32>
    %37 = vector.shape_cast %36 : vector<1x1x1xf32> to vector<1x1xf32>
    %38 = arith.mulf %32, %32 : vector<8x256xf32>
    %39 = vector.shape_cast %38 : vector<8x256xf32> to vector<1x8x256xf32>
    %cst_25 = arith.constant dense<0.000000e+00> : vector<1xf32>
    %40 = vector.multi_reduction <add>, %39, %cst_25 [1, 2] : vector<1x8x256xf32> to vector<1xf32>
    %41 = vector.shape_cast %40 : vector<1xf32> to vector<1x1x1xf32>
    %42 = vector.extract %41[0, 0, 0] : f32 from vector<1x1x1xf32>
    %43 = vector.broadcast %42 : f32 to vector<1x1xf32>
    %44 = arith.addf %37, %43 : vector<1x1xf32>
    %c0_26 = arith.constant 0 : index
    %c0_27 = arith.constant 0 : index
    %c0_28 = arith.constant 0 : index
    %45 = vector.load %arg10[%c0_26, %c0_27, %c0_28] : memref<1x1x1xf32, #tpu.memory_space<vmem>>, vector<1x1x1xf32>
    %46 = vector.shape_cast %45 : vector<1x1x1xf32> to vector<1x1xf32>
    %47 = vector.shape_cast %44 : vector<1x1xf32> to vector<1x1x1xf32>
    tpu.vector_store %arg10[%c0_26, %c0_27, %c0_28], %47 {strides = array<i32>} : memref<1x1x1xf32, #tpu.memory_space<vmem>>, vector<1x1x1xf32>,
    return
  }
  func.func @transform_0(%arg0: i32, %arg1: i32) -> i32 {
    %c0_i32 = arith.constant 0 : i32
    %c0_i32_0 = arith.constant 0 : i32
    return %c0_i32 : i32
  }
  func.func @transform_1(%arg0: i32, %arg1: i32) -> (i32, i32, i32) {
    %c0_i32 = arith.constant 0 : i32
    %c0_i32_0 = arith.constant 0 : i32
    return %arg0, %c0_i32, %arg1 : i32, i32, i32
  }
  func.func @transform_2(%arg0: i32, %arg1: i32) -> (i32, i32, i32) {
    %c0_i32 = arith.constant 0 : i32
    %c0_i32_0 = arith.constant 0 : i32
    return %arg0, %c0_i32, %arg1 : i32, i32, i32
  }
  func.func @transform_3(%arg0: i32, %arg1: i32) -> (i32, i32, i32) {
    %c0_i32 = arith.constant 0 : i32
    %c0_i32_0 = arith.constant 0 : i32
    return %arg0, %c0_i32, %arg1 : i32, i32, i32
  }
  func.func @transform_4(%arg0: i32, %arg1: i32) -> (i32, i32, i32) {
    %c0_i32 = arith.constant 0 : i32
    %c0_i32_0 = arith.constant 0 : i32
    return %arg0, %c0_i32, %arg1 : i32, i32, i32
  }
  func.func @transform_5(%arg0: i32, %arg1: i32) -> (i32, i32) {
    %c0_i32 = arith.constant 0 : i32
    %c0_i32_0 = arith.constant 0 : i32
    %c0_i32_1 = arith.constant 0 : i32
    return %c0_i32, %c0_i32_0 : i32, i32
  }
  func.func @transform_6(%arg0: i32, %arg1: i32) -> (i32, i32) {
    %c0_i32 = arith.constant 0 : i32
    %c0_i32_0 = arith.constant 0 : i32
    %c0_i32_1 = arith.constant 0 : i32
    return %c0_i32, %c0_i32_0 : i32, i32
  }
  func.func @transform_7(%arg0: i32, %arg1: i32) -> (i32, i32, i32) {
    %c0_i32 = arith.constant 0 : i32
    %c0_i32_0 = arith.constant 0 : i32
    return %arg0, %c0_i32, %arg1 : i32, i32, i32
  }
  func.func @transform_8(%arg0: i32, %arg1: i32) -> (i32, i32, i32) {
    %c0_i32 = arith.constant 0 : i32
    %c0_i32_0 = arith.constant 0 : i32
    %c0_i32_1 = arith.constant 0 : i32
    return %arg0, %c0_i32, %c0_i32_0 : i32, i32, i32
  }
}

</mosaic_0001>

<llo_original>
// kernel: tpu_custom_call.1
$region0: #{tpu_custom_call.1}
  #allocation0 [shape = 'u32[]', space=smem, size = 0x4, offset = 0x4, fixed_abs, tag = 'smem constant byte address 0x4 - core index']
  #allocation1 [shape = 'u32[144,128]{1,0:T(1,128)}', space=vmem, size = 0x12000, scoped, tag = 'internal scratch']
  %s0 = inlined_call_operand.vmem [shape: f32[2], index: 0, kind: input, shape index: {}]
  %s1 = inlined_call_operand.hbm [shape: f32[2,8,512], index: 1, kind: input, shape index: {}]
  %s2 = inlined_call_operand.hbm [shape: f32[2,8,512], index: 2, kind: input, shape index: {}]
  %s3 = inlined_call_operand.hbm [shape: f32[2,8,512], index: 3, kind: input, shape index: {}]
  %s4 = inlined_call_operand.vmem [shape: f32[2,1,512], index: 4, kind: input, shape index: {}]
  %s5 = inlined_call_operand.vmem [shape: bf16[8,16], index: 5, kind: input, shape index: {}]
  %s6 = inlined_call_operand.vmem [shape: f32[8,1], index: 6, kind: input, shape index: {}]
  %s7 = inlined_call_operand.hbm [shape: f32[2,8,512], index: 7, kind: output, shape index: {0}]
  %s8 = inlined_call_operand.vmem [shape: f32[2,1,1], index: 8, kind: output, shape index: {1}]
  %9 = xla_tuple %s7, %s8
  %s10 = sld [smem:[#allocation0]]
  $region89: #{tpu_custom_call.1} parent=0
    _
  %s12 = ssub.s32 1, %s10
  %s13 = scalar_select 0, %s12, %s10
  $region1: #{tpu_custom_call.1} parent=0
    #allocation2 [shape = 'u8[512]{0}', space=smem, size = 0x200, scoped, tag = 'input window, operand 0, single buffered']
    #allocation3 [shape = 's32[2]{0}', space=sflag, size = 0x8, scoped, tag = 'scoped memory for tpu_custom_call.1']
    #allocation4 [shape = 's32[2]{0}', space=sflag, size = 0x8, scoped, tag = 'scoped memory for tpu_custom_call.1']
    #allocation5 [shape = 's32[2]{0}', space=sflag, size = 0x8, scoped, tag = 'scoped memory for tpu_custom_call.1']
    #allocation6 [shape = 'u8[16384]{0}', space=vmem, size = 0x4000, scoped, tag = 'input window, operand 1']
    #allocation7 [shape = 'u8[16384]{0}', space=vmem, size = 0x4000, scoped, tag = 'input window, operand 2']
    #allocation8 [shape = 's32[2]{0}', space=sflag, size = 0x8, scoped, tag = 'scoped memory for tpu_custom_call.1']
    #allocation9 [shape = 'u8[16384]{0}', space=vmem, size = 0x4000, scoped, tag = 'input window, operand 3']
    #allocation10 [shape = 'u8[16384]{0}', space=vmem, size = 0x4000, scoped, tag = 'output window, operand 0']
    %14 = vsyncpa [#allocation5], 0
    %15 = vsyncpa [#allocation3], 0
    %s16 = scalar_lea.sflag [#allocation3], 1
    %17 = vsyncpa %s16, 0
    %18 = vsyncpa [#allocation8], 0
    %s19 = scalar_lea.sflag [#allocation8], 1
    %20 = vsyncpa %s19, 0
    %21 = vsyncpa [#allocation4], 0
    %s22 = scalar_lea.sflag [#allocation4], 1
    %23 = vsyncpa %s22, 0
    loop: start=0, step=1, limit=6
    $region2: #{tpu_custom_call.1} parent=1 // loop_pre_header
      _
    $region3: #{tpu_custom_call.1} parent=1 // loop_header
      %s25 = sphi 0, %s29
      %p26 = scmp.ge.s32.totalorder %s25, 6
      %s32 = sphi 0, %s44
      %s33 = sphi 0, %s40
      %s34 = sphi 0, %s32
      %s35 = sphi 0, %s33
      %s36 = sphi 0, %s34
      %s37 = sphi 0, %s35
      %s45 = sphi 0, %s45
      %s47 = sphi 0, %s45
      %s48 = sphi 0, %s47
      %s62 = sphi 0, %s48
      %s70 = sphi 0, %s72
      %s73 = sphi 0, %s70
      %s74 = sphi 0, %s73
      %s90 = sphi 0, %s74
      %s98 = sphi 0, %s100
      %s101 = sphi 0, %s98
      %s102 = sphi 0, %s101
      %s118 = sphi 0, %s102
      %s126 = sphi 0, %s128
      %s129 = sphi 0, %s126
      %s130 = sphi 0, %s129
      %s146 = sphi 0, %s130
      %s154 = sphi 0, %s156
      %s157 = sphi 0, %s154
      %s158 = sphi 0, %s157
      %s174 = sphi 0, %s158
      %s178 = sphi 0, %s178
      %s180 = sphi 0, %s178
      %s181 = sphi 0, %s180
      %s195 = sphi 0, %s181
      %s199 = sphi 0, %s199
      %s201 = sphi 0, %s199
      %s202 = sphi 0, %s201
      %s216 = sphi 0, %s202
      %s224 = sphi 0, %s226
      %s227 = sphi 0, %s224
      %s228 = sphi 0, %s227
      %s244 = sphi 0, %s228
      %s250 = sphi 0, %s252
      %s253 = sphi 0, %s250
      %s254 = sphi 0, %s253
      %s270 = sphi 0, %s254
    $region4: #{tpu_custom_call.1} parent=1 // loop_header_branch
      %28 = sbr.rel (%p26) target = $region8
    $region5: #{tpu_custom_call.1} parent=1 // loop_body
      %s30 = ssub.s32 %s25, 1
      %s31 = ssub.s32 %s25, 2
      %s38 = sadd.s32 1, %s33
      %p39 = scmp.ge.s32.totalorder %s38, 2
      %s40 = scalar_select %p39, 0, %s38
      %s41 = sadd.s32 1, %s32
      %s42 = scalar_select %p39, %s41, %s32
      %p43 = scmp.ge.s32.totalorder %s42, 2
      %s44 = scalar_select %p43, 0, %s42
      %s46 = sadd.s32 %s45, 1
      %p49 = scmp.eq.s32.totalorder %s25, 3
      %p50 = scmp.ne.s32.totalorder %s45, %s47
      %p51 = scmp.eq.s32.totalorder %s25, 0
      %p52 = por %p50, %p51
      %p53 = scmp.ne.s32.totalorder %s45, %s47
      %p54 = scmp.eq.s32.totalorder %s30, 3
      %p55 = por %p53, %p54
      %p56 = scmp.ne.s32.totalorder %s47, %s48
      %p57 = scmp.eq.s32.totalorder %s30, 0
      %p58 = por %p56, %p57
      %p59 = scmp.ne.s32.totalorder %s47, %s48
      %p60 = scmp.eq.s32.totalorder %s31, 3
      %p61 = por %p59, %p60
      %p63 = scmp.ne.s32.totalorder %s48, %s62
      %p64 = scmp.eq.s32.totalorder %s31, 0
      %p65 = por %p63, %p64
      %s66 = ssub.s32 %s32, %s44
      %s67 = ssub.s32 %s33, %s40
      %s68 = sor.u32 %s66, %s67
      %p69 = scmp.eq.s32.totalorder %s68, 0
      %s71 = sadd.s32 %s70, 1
      %s72 = scalar_select %p69, %s70, %s71
      %p75 = pneg %p69
      %p76 = scmp.eq.s32.totalorder %s25, 3
      %p77 = por %p75, %p76
      %p78 = scmp.ne.s32.totalorder %s70, %s73
      %p79 = scmp.eq.s32.totalorder %s25, 0
      %p80 = por %p78, %p79
      %p81 = scmp.ne.s32.totalorder %s70, %s73
      %p82 = scmp.eq.s32.totalorder %s30, 3
      %p83 = por %p81, %p82
      %p84 = scmp.ne.s32.totalorder %s73, %s74
      %p85 = scmp.eq.s32.totalorder %s30, 0
      %p86 = por %p84, %p85
      %p87 = scmp.ne.s32.totalorder %s73, %s74
      %p88 = scmp.eq.s32.totalorder %s31, 3
      %p89 = por %p87, %p88
      %p91 = scmp.ne.s32.totalorder %s74, %s90
      %p92 = scmp.eq.s32.totalorder %s31, 0
      %p93 = por %p91, %p92
      %s94 = ssub.s32 %s32, %s44
      %s95 = ssub.s32 %s33, %s40
      %s96 = sor.u32 %s94, %s95
      %p97 = scmp.eq.s32.totalorder %s96, 0
      %s99 = sadd.s32 %s98, 1
      %s100 = scalar_select %p97, %s98, %s99
      %p103 = pneg %p97
      %p104 = scmp.eq.s32.totalorder %s25, 3
      %p105 = por %p103, %p104
      %p106 = scmp.ne.s32.totalorder %s98, %s101
      %p107 = scmp.eq.s32.totalorder %s25, 0
      %p108 = por %p106, %p107
      %p109 = scmp.ne.s32.totalorder %s98, %s101
      %p110 = scmp.eq.s32.totalorder %s30, 3
      %p111 = por %p109, %p110
      %p112 = scmp.ne.s32.totalorder %s101, %s102
      %p113 = scmp.eq.s32.totalorder %s30, 0
      %p114 = por %p112, %p113
      %p115 = scmp.ne.s32.totalorder %s101, %s102
      %p116 = scmp.eq.s32.totalorder %s31, 3
      %p117 = por %p115, %p116
      %p119 = scmp.ne.s32.totalorder %s102, %s118
      %p120 = scmp.eq.s32.totalorder %s31, 0
      %p121 = por %p119, %p120
      %s122 = ssub.s32 %s32, %s44
      %s123 = ssub.s32 %s33, %s40
      %s124 = sor.u32 %s122, %s123
      %p125 = scmp.eq.s32.totalorder %s124, 0
      %s127 = sadd.s32 %s126, 1
      %s128 = scalar_select %p125, %s126, %s127
      %p131 = pneg %p125
      %p132 = scmp.eq.s32.totalorder %s25, 3
      %p133 = por %p131, %p132
      %p134 = scmp.ne.s32.totalorder %s126, %s129
      %p135 = scmp.eq.s32.totalorder %s25, 0
      %p136 = por %p134, %p135
      %p137 = scmp.ne.s32.totalorder %s126, %s129
      %p138 = scmp.eq.s32.totalorder %s30, 3
      %p139 = por %p137, %p138
      %p140 = scmp.ne.s32.totalorder %s129, %s130
      %p141 = scmp.eq.s32.totalorder %s30, 0
      %p142 = por %p140, %p141
      %p143 = scmp.ne.s32.totalorder %s129, %s130
      %p144 = scmp.eq.s32.totalorder %s31, 3
      %p145 = por %p143, %p144
      %p147 = scmp.ne.s32.totalorder %s130, %s146
      %p148 = scmp.eq.s32.totalorder %s31, 0
      %p149 = por %p147, %p148
      %s150 = ssub.s32 %s32, %s44
      %s151 = ssub.s32 %s33, %s40
      %s152 = sor.u32 %s150, %s151
      %p153 = scmp.eq.s32.totalorder %s152, 0
      %s155 = sadd.s32 %s154, 1
      %s156 = scalar_select %p153, %s154, %s155
      %p159 = pneg %p153
      %p160 = scmp.eq.s32.totalorder %s25, 3
      %p161 = por %p159, %p160
      %p162 = scmp.ne.s32.totalorder %s154, %s157
      %p163 = scmp.eq.s32.totalorder %s25, 0
      %p164 = por %p162, %p163
      %p165 = scmp.ne.s32.totalorder %s154, %s157
      %p166 = scmp.eq.s32.totalorder %s30, 3
      %p167 = por %p165, %p166
      %p168 = scmp.ne.s32.totalorder %s157, %s158
      %p169 = scmp.eq.s32.totalorder %s30, 0
      %p170 = por %p168, %p169
      %p171 = scmp.ne.s32.totalorder %s157, %s158
      %p172 = scmp.eq.s32.totalorder %s31, 3
      %p173 = por %p171, %p172
      %p175 = scmp.ne.s32.totalorder %s158, %s174
      %p176 = scmp.eq.s32.totalorder %s31, 0
      %p177 = por %p175, %p176
      %s179 = sadd.s32 %s178, 1
      %p182 = scmp.eq.s32.totalorder %s25, 3
      %p183 = scmp.ne.s32.totalorder %s178, %s180
      %p184 = scmp.eq.s32.totalorder %s25, 0
      %p185 = por %p183, %p184
      %p186 = scmp.ne.s32.totalorder %s178, %s180
      %p187 = scmp.eq.s32.totalorder %s30, 3
      %p188 = por %p186, %p187
      %p189 = scmp.ne.s32.totalorder %s180, %s181
      %p190 = scmp.eq.s32.totalorder %s30, 0
      %p191 = por %p189, %p190
      %p192 = scmp.ne.s32.totalorder %s180, %s181
      %p193 = scmp.eq.s32.totalorder %s31, 3
      %p194 = por %p192, %p193
      %p196 = scmp.ne.s32.totalorder %s181, %s195
      %p197 = scmp.eq.s32.totalorder %s31, 0
      %p198 = por %p196, %p197
      %s200 = sadd.s32 %s199, 1
      %p203 = scmp.eq.s32.totalorder %s25, 3
      %p204 = scmp.ne.s32.totalorder %s199, %s201
      %p205 = scmp.eq.s32.totalorder %s25, 0
      %p206 = por %p204, %p205
      %p207 = scmp.ne.s32.totalorder %s199, %s201
      %p208 = scmp.eq.s32.totalorder %s30, 3
      %p209 = por %p207, %p208
      %p210 = scmp.ne.s32.totalorder %s201, %s202
      %p211 = scmp.eq.s32.totalorder %s30, 0
      %p212 = por %p210, %p211
      %p213 = scmp.ne.s32.totalorder %s201, %s202
      %p214 = scmp.eq.s32.totalorder %s31, 3
      %p215 = por %p213, %p214
      %p217 = scmp.ne.s32.totalorder %s202, %s216
      %p218 = scmp.eq.s32.totalorder %s31, 0
      %p219 = por %p217, %p218
      %s220 = ssub.s32 %s32, %s44
      %s221 = ssub.s32 %s33, %s40
      %s222 = sor.u32 %s220, %s221
      %p223 = scmp.eq.s32.totalorder %s222, 0
      %s225 = sadd.s32 %s224, 1
      %s226 = scalar_select %p223, %s224, %s225
      %p229 = pneg %p223
      %p230 = scmp.eq.s32.totalorder %s25, 3
      %p231 = por %p229, %p230
      %p232 = scmp.ne.s32.totalorder %s224, %s227
      %p233 = scmp.eq.s32.totalorder %s25, 0
      %p234 = por %p232, %p233
      %p235 = scmp.ne.s32.totalorder %s224, %s227
      %p236 = scmp.eq.s32.totalorder %s30, 3
      %p237 = por %p235, %p236
      %p238 = scmp.ne.s32.totalorder %s227, %s228
      %p239 = scmp.eq.s32.totalorder %s30, 0
      %p240 = por %p238, %p239
      %p241 = scmp.ne.s32.totalorder %s227, %s228
      %p242 = scmp.eq.s32.totalorder %s31, 3
      %p243 = por %p241, %p242
      %p245 = scmp.ne.s32.totalorder %s228, %s244
      %p246 = scmp.eq.s32.totalorder %s31, 0
      %p247 = por %p245, %p246
      %s248 = ssub.s32 %s32, %s44
      %p249 = scmp.eq.s32.totalorder %s248, 0
      %s251 = sadd.s32 %s250, 1
      %s252 = scalar_select %p249, %s250, %s251
      %p255 = pneg %p249
      %p256 = scmp.eq.s32.totalorder %s25, 3
      %p257 = por %p255, %p256
      %p258 = scmp.ne.s32.totalorder %s250, %s253
      %p259 = scmp.eq.s32.totalorder %s25, 0
      %p260 = por %p258, %p259
      %p261 = scmp.ne.s32.totalorder %s250, %s253
      %p262 = scmp.eq.s32.totalorder %s30, 3
      %p263 = por %p261, %p262
      %p264 = scmp.ne.s32.totalorder %s253, %s254
      %p265 = scmp.eq.s32.totalorder %s30, 0
      %p266 = por %p264, %p265
      %p267 = scmp.ne.s32.totalorder %s253, %s254
      %p268 = scmp.eq.s32.totalorder %s31, 3
      %p269 = por %p267, %p268
      %p271 = scmp.ne.s32.totalorder %s254, %s270
      %p272 = scmp.eq.s32.totalorder %s31, 0
      %p273 = por %p271, %p272
      %p274 = scmp.le.s32.totalorder 1, %s25
      %p275 = scmp.lt.s32.totalorder %s25, 5
      %p276 = pnand %p274, %p275
      %p277 = pneg %p276
      // Predicated region
      $region9: #{tpu_custom_call.1} parent=5 // pred_check
        _
      $region10: #{tpu_custom_call.1} parent=5 // pred_check_branch
        %279 = sbr.rel (%p276) target = $region12
      $region11: #{tpu_custom_call.1} parent=5 // pred_region
        %s280 = ssub.s32 %s25, 1
        // Predicated region
        $region13: #{tpu_custom_call.1} parent=11 // pred_check
          %p281 = pneg %p58
        $region14: #{tpu_custom_call.1} parent=11 // pred_check_branch
          %283 = sbr.rel (%p281) target = $region16
        $region15: #{tpu_custom_call.1} parent=11 // pred_region
          %s285 = ssub.s32 16, 16
          %286 = vsyncadd [#allocation5], %s285
          %s288 = sshll.u32 %s0, 4
          %s289 = int_to_ptr.vmem [resolvable:$true] %s288
          %291 = dma.vmem_to_smem %s289, 16, [#allocation2], [#allocation5]
        $region16: #{tpu_custom_call.1} parent=11 // pred_fallthru
          _
        // Predicated region
        $region17: #{tpu_custom_call.1} parent=11 // pred_check
          %p292 = pneg %p191
        $region18: #{tpu_custom_call.1} parent=11 // pred_check_branch
          %294 = sbr.rel (%p292) target = $region20
        $region19: #{tpu_custom_call.1} parent=11 // pred_region
          _
        $region20: #{tpu_custom_call.1} parent=11 // pred_fallthru
          _
        // Predicated region
        $region21: #{tpu_custom_call.1} parent=11 // pred_check
          %p295 = pneg %p212
        $region22: #{tpu_custom_call.1} parent=11 // pred_check_branch
          %297 = sbr.rel (%p295) target = $region24
        $region23: #{tpu_custom_call.1} parent=11 // pred_region
          _
        $region24: #{tpu_custom_call.1} parent=11 // pred_fallthru
          _
      $region12: #{tpu_custom_call.1} parent=5 // pred_fallthru
        _
      %p298 = scmp.lt.s32.totalorder %s25, 4
      // Predicated region
      $region25: #{tpu_custom_call.1} parent=5 // pred_check
        %p299 = pneg %p298
      $region26: #{tpu_custom_call.1} parent=5 // pred_check_branch
        %301 = sbr.rel (%p299) target = $region28
      $region27: #{tpu_custom_call.1} parent=5 // pred_region
        // Predicated region
        $region29: #{tpu_custom_call.1} parent=27 // pred_check
          %p302 = pneg %p80
        $region30: #{tpu_custom_call.1} parent=27 // pred_check_branch
          %304 = sbr.rel (%p302) target = $region32
        $region31: #{tpu_custom_call.1} parent=27 // pred_region
          %s305 = sand.u32 %s70, 1
          %s306 = scalar_lea.sflag [#allocation3], %s305
          %s307 = sand.u32 %s70, 1
          %s308 = smul.addr %s307, 16
          %s309 = scalar_lea.vmem [#allocation6], %s308
          %s310 = smul.u32 2, %s33
          %s312 = ssub.s32 256, 256
          %313 = vsyncadd %s306, %s312
          %s314 = smul.addr %s32, 4
          %s315 = sadd.s32 %s310, %s314
          %s316 = smul.addr %s315, 128
          %s317 = scalar_lea.hbm %s1, %s316
          %s319 = sshll.u32 %s309, 4
          %s320 = int_to_ptr.vmem [resolvable:$true] %s319
          %322 = dma.hbm_to_vmem [thread:$0]  %s317, 256, %s320, %s306
        $region32: #{tpu_custom_call.1} parent=27 // pred_fallthru
          _
        // Predicated region
        $region33: #{tpu_custom_call.1} parent=27 // pred_check
          %p323 = pneg %p108
        $region34: #{tpu_custom_call.1} parent=27 // pred_check_branch
          %325 = sbr.rel (%p323) target = $region36
        $region35: #{tpu_custom_call.1} parent=27 // pred_region
          %s326 = sand.u32 %s25, 1
          %s327 = scalar_lea.sflag [#allocation8], %s326
          %s328 = sand.u32 %s98, 1
          %s329 = smul.addr %s328, 16
          %s330 = scalar_lea.vmem [#allocation7], %s329
          %s331 = smul.u32 2, %s33
          %s333 = ssub.s32 256, 256
          %334 = vsyncadd %s327, %s333
          %s335 = smul.addr %s32, 4
          %s336 = sadd.s32 %s331, %s335
          %s337 = smul.addr %s336, 128
          %s338 = scalar_lea.hbm %s2, %s337
          %s340 = sshll.u32 %s330, 4
          %s341 = int_to_ptr.vmem [resolvable:$true] %s340
          %343 = dma.hbm_to_vmem [thread:$0]  %s338, 256, %s341, %s327
        $region36: #{tpu_custom_call.1} parent=27 // pred_fallthru
          _
        // Predicated region
        $region37: #{tpu_custom_call.1} parent=27 // pred_check
          %p344 = pneg %p136
        $region38: #{tpu_custom_call.1} parent=27 // pred_check_branch
          %346 = sbr.rel (%p344) target = $region40
        $region39: #{tpu_custom_call.1} parent=27 // pred_region
          %s347 = sand.u32 %s25, 1
          %s348 = scalar_lea.sflag [#allocation8], %s347
          %s349 = sand.u32 %s126, 1
          %s350 = smul.addr %s349, 16
          %s351 = scalar_lea.vmem [#allocation9], %s350
          %s352 = smul.u32 2, %s33
          %s354 = ssub.s32 256, 256
          %355 = vsyncadd %s348, %s354
          %s356 = smul.addr %s32, 4
          %s357 = sadd.s32 %s352, %s356
          %s358 = smul.addr %s357, 128
          %s359 = scalar_lea.hbm %s3, %s358
          %s361 = sshll.u32 %s351, 4
          %s362 = int_to_ptr.vmem [resolvable:$true] %s361
          %364 = dma.hbm_to_vmem [thread:$0]  %s359, 256, %s362, %s348
        $region40: #{tpu_custom_call.1} parent=27 // pred_fallthru
          _
        // Predicated region
        $region41: #{tpu_custom_call.1} parent=27 // pred_check
          %p365 = pneg %p164
        $region42: #{tpu_custom_call.1} parent=27 // pred_check_branch
          %367 = sbr.rel (%p365) target = $region44
        $region43: #{tpu_custom_call.1} parent=27 // pred_region
          %s368 = smul.u32 2, %s33
          %p369 = scmp.lt.s32.totalorder %s32, 1
          %s370 = scalar_select %p369, %s32, 1
          %p371 = scmp.lt.s32.totalorder %s368, 3
          %s372 = scalar_select %p371, %s368, 3
          %s373 = smul.addr %s370, 4
          %s374 = sadd.s32 %s372, %s373
          %s375 = scalar_lea.vmem %s4, %s374
          %s376 = smul.u32 2, %s33
        $region44: #{tpu_custom_call.1} parent=27 // pred_fallthru
          _
      $region28: #{tpu_custom_call.1} parent=5 // pred_fallthru
        _
      %p377 = scmp.le.s32.totalorder 1, %s25
      %p378 = scmp.lt.s32.totalorder %s25, 5
      %p379 = pnand %p377, %p378
      %p380 = pneg %p379
      // Predicated region
      $region45: #{tpu_custom_call.1} parent=5 // pred_check
        _
      $region46: #{tpu_custom_call.1} parent=5 // pred_check_branch
        %382 = sbr.rel (%p379) target = $region48
      $region47: #{tpu_custom_call.1} parent=5 // pred_region
        %s383 = ssub.s32 %s25, 1
        // Predicated region
        $region49: #{tpu_custom_call.1} parent=47 // pred_check
          %p384 = pneg %p58
        $region50: #{tpu_custom_call.1} parent=47 // pred_check_branch
          %386 = sbr.rel (%p384) target = $region52
        $region51: #{tpu_custom_call.1} parent=47 // pred_region
          %387 = dma.done [#allocation5], 16
        $region52: #{tpu_custom_call.1} parent=47 // pred_fallthru
          _
        %s388 = sand.u32 %s73, 1
        %s389 = scalar_lea.sflag [#allocation3], %s388
        %s390 = sand.u32 %s73, 1
        %s391 = smul.addr %s390, 16
        %s392 = scalar_lea.vmem [#allocation6], %s391
        // Predicated region
        $region53: #{tpu_custom_call.1} parent=47 // pred_check
          %p393 = pneg %p86
        $region54: #{tpu_custom_call.1} parent=47 // pred_check_branch
          %395 = sbr.rel (%p393) target = $region56
        $region55: #{tpu_custom_call.1} parent=47 // pred_region
          %396 = dma.done %s389, 256
        $region56: #{tpu_custom_call.1} parent=47 // pred_fallthru
          _
        %s397 = sand.u32 %s30, 1
        %s398 = scalar_lea.sflag [#allocation8], %s397
        %s399 = sand.u32 %s101, 1
        %s400 = smul.addr %s399, 16
        %s401 = scalar_lea.vmem [#allocation7], %s400
        // Predicated region
        $region57: #{tpu_custom_call.1} parent=47 // pred_check
          %p402 = pneg %p114
        $region58: #{tpu_custom_call.1} parent=47 // pred_check_branch
          %404 = sbr.rel (%p402) target = $region60
        $region59: #{tpu_custom_call.1} parent=47 // pred_region
          %405 = dma.done %s398, 256
        $region60: #{tpu_custom_call.1} parent=47 // pred_fallthru
          _
        %s406 = sand.u32 %s30, 1
        %s407 = scalar_lea.sflag [#allocation8], %s406
        %s408 = sand.u32 %s129, 1
        %s409 = smul.addr %s408, 16
        %s410 = scalar_lea.vmem [#allocation9], %s409
        // Predicated region
        $region61: #{tpu_custom_call.1} parent=47 // pred_check
          %p411 = pneg %p142
        $region62: #{tpu_custom_call.1} parent=47 // pred_check_branch
          %413 = sbr.rel (%p411) target = $region64
        $region63: #{tpu_custom_call.1} parent=47 // pred_region
          %414 = dma.done %s407, 256
        $region64: #{tpu_custom_call.1} parent=47 // pred_fallthru
          _
        %415 = sfence
        %p416 = pneg %p58
        %p417 = pneg %p55
        %s418 = sand.u32 %s73, 1
        %s419 = scalar_lea.sflag [#allocation3], %s418
        %s420 = sand.u32 %s73, 1
        %s421 = smul.addr %s420, 16
        %s422 = scalar_lea.vmem [#allocation6], %s421
        %p423 = pneg %p86
        %p424 = pneg %p83
        %s425 = sand.u32 %s30, 1
        %s426 = scalar_lea.sflag [#allocation8], %s425
        %s427 = sand.u32 %s101, 1
        %s428 = smul.addr %s427, 16
        %s429 = scalar_lea.vmem [#allocation7], %s428
        %p430 = pneg %p114
        %p431 = pneg %p111
        %s432 = sand.u32 %s30, 1
        %s433 = scalar_lea.sflag [#allocation8], %s432
        %s434 = sand.u32 %s129, 1
        %s435 = smul.addr %s434, 16
        %s436 = scalar_lea.vmem [#allocation9], %s435
        %p437 = pneg %p142
        %p438 = pneg %p139
        %s439 = smul.u32 2, %s35
        %p440 = scmp.lt.s32.totalorder %s34, 1
        %s441 = scalar_select %p440, %s34, 1
        %p442 = scmp.lt.s32.totalorder %s439, 3
        %s443 = scalar_select %p442, %s439, 3
        %s444 = smul.addr %s441, 4
        %s445 = sadd.s32 %s443, %s444
        %s446 = scalar_lea.vmem %s4, %s445
        %p447 = pneg %p170
        %p448 = pneg %p167
        %p449 = pneg %p191
        %p450 = pneg %p188
        %p451 = pneg %p212
        %p452 = pneg %p209
        %p453 = pneg %p240
        %p454 = pneg %p237
        %s455 = sand.u32 %s227, 1
        %s456 = scalar_lea.sflag [#allocation4], %s455
        %s457 = sand.u32 %s227, 1
        %s458 = smul.addr %s457, 16
        %s459 = scalar_lea.vmem [#allocation10], %s458
        %p460 = pneg %p266
        %p461 = pneg %p263
        %p462 = scmp.lt.s32.totalorder %s34, 1
        %s463 = scalar_select %p462, %s34, 1
        %s464 = scalar_lea.vmem %s8, %s463
        %s465 = smul.u32 2, %s35
        %s466 = smul.u32 2, %s35
        %s467 = smul.u32 2, %s35
        %s468 = smul.u32 2, %s35
        %p469 = scmp.lt.s32.totalorder %s34, 1
        %s470 = scalar_select %p469, %s34, 1
        %p471 = scmp.lt.s32.totalorder %s468, 3
        %s472 = scalar_select %p471, %s468, 3
        %s473 = smul.addr %s470, 4
        %s474 = sadd.s32 %s472, %s473
        %s475 = scalar_lea.vmem %s4, %s474
        %s476 = smul.u32 2, %s35
        %s477 = smul.u32 2, %s35
        %p478 = scmp.lt.s32.totalorder %s34, 1
        %s479 = scalar_select %p478, %s34, 1
        %s480 = scalar_lea.vmem %s8, %s479
        %s482 = sld [smem:[#allocation2 + %s34]]
        %v483 = vld [vmem:[%s392] sm:$0xff]
        %v484 = vld [vmem:[%s392 + $0x8] sm:$0xff]
        %v485 = vld [vmem:[%s401] sm:$0xff]
        %v486 = vld [vmem:[%s401 + $0x8] sm:$0xff]
        %v487 = vld [vmem:[%s410] sm:$0xff]
        %v488 = vld [vmem:[%s410 + $0x8] sm:$0xff]
        %v489 = vld [vmem:[%s475] sm:$0x3]
        %s490 = smul.f32 %s482, 0.9
        %s491 = ssub.f32 1.0, %s490
        %v492 = vstv %s482
        %v493 = vmul.f32 %v492, %v483
        %v494 = vmul.f32 %v492, %v484
        %v495 = vstv %s491
        %v496 = vmul.f32 %v495, %v485
        %v497 = vmul.f32 %v495, %v486
        %v498 = vadd.f32 %v493, %v496
        %v499 = vadd.f32 %v494, %v497
        %v500 = vmul.f32 %v485, -0.9
        %v501 = vmul.f32 %v486, -0.9
        %v502 = vadd.f32 %v483, %v500
        %v503 = vadd.f32 %v484, %v501
        %v504 = vpack.c.bf16 %v487, %v498
        %v505 = vpack.c.bf16 %v488, %v499
        %v506 = vld [vmem:[%s5] sm:$0xf]
        %v507 = vld [vmem:[%s6] sm:$0xff]
        %509 = vset.pattern.permute.xlu0 0
        %510 = vperm.xlu0 %509, %v507
        %v511 = vpop.permute.xlu0 %510
        %vm513 = vcmask 130048
        %v515 = vsel %vm513, %v506, 0
        %517 = vmatprep.subr.bf16.mxu0 0
        %518 = vmatpush1.bf16.msra.mxu0 0
        %519 = vmatprep.subr.bf16.mxu0 0
        %520 = vmatpush1.bf16.msra.mxu0 0
        %521 = vmatprep.subr.bf16.mxu0 0
        %522 = vmatpush1.bf16.msra.mxu0 0
        %523 = vmatprep.subr.bf16.mxu0 0
        %524 = vmatpush1.bf16.msra.mxu0 0
        %525 = vmatprep.subr.bf16.mxu0 0
        %526 = vmatpush1.bf16.msra.mxu0 0
        %527 = vmatprep.subr.bf16.mxu0 0
        %528 = vmatpush1.bf16.msra.mxu0 0
        %529 = vmatprep.subr.bf16.mxu0 0
        %530 = vmatpush1.bf16.msra.mxu0 0
        %531 = vmatprep.subr.bf16.mxu0 %v505
        %532 = vmatpush1.bf16.msra.mxu0 %v504
        %533 = vmatprep.subr.bf16.mxu0 0
        %534 = vmatpush2.bf16.msra.mxu0 0
        %535 = vmatprep.subr.bf16.mxu0 0
        %536 = vmatpush2.bf16.msra.mxu0 0
        %537 = vmatprep.subr.bf16.mxu0 0
        %538 = vmatpush2.bf16.msra.mxu0 0
        %539 = vmatprep.subr.bf16.mxu0 0
        %540 = vmatpush2.bf16.msra.mxu0 0
        %541 = vmatprep.subr.bf16.mxu0 0
        %542 = vmatpush2.bf16.msra.mxu0 0
        %543 = vmatprep.subr.bf16.mxu0 0
        %544 = vmatpush2.bf16.msra.mxu0 0
        %545 = vmatprep.subr.bf16.mxu0 0
        %546 = vmatpush2.bf16.msra.mxu0 0
        %547 = vmatprep.subr.bf16.mxu0 0
        %548 = vmatpush2.bf16.msra.mxu0 0
        %549 = vmatprep.mubr.bf16.mxu0 0
        %550 = vmatmul.mubr.bf16.gmra.mxu0 %v515
        %v551 = vpop.f32.mrf.mxu0
        %v552 = vadd.f32 %v511, %v551
        %v553 = vpop.f32.mrf.mxu0
        %v554 = vadd.f32 %v511, %v553
        %v555 = vpop.f32.mrf.mxu0
        %v556 = vpop.f32.mrf.mxu0
        %557 = vdwg.mxu0
        %v559 = vlaneseq
        %v560 = vshrl.u32 %v559, 7
        %v561 = vsub.s32 0, %v560
        %v562 = vrot.slane %v489, %v561
        %v563 = vlaneseq
        %v564 = vshrl.u32 %v563, 7
        %v565 = vsub.s32 1, %v564
        %v566 = vrot.slane %v489, %v565
        %v569 = vmul.f32 %v552, %v562
        %v570 = vmul.f32 %v554, %v566
        %571 = vst [vmem:[%s459] sm:$0xff] %v498
        %572 = vst [vmem:[%s459 + $0x8] sm:$0xff] %v499
        %v573 = vsub.f32 %v502, %v569
        %v574 = vsub.f32 %v503, %v570
        %p575 = scmp.eq.s32.totalorder %s35, 0
        // Predicated region
        $region65: #{tpu_custom_call.1} parent=47 // pred_check
          %p576 = pneg %p575
        $region66: #{tpu_custom_call.1} parent=47 // pred_check_branch
          %578 = sbr.rel (%p576) target = $region68
        $region67: #{tpu_custom_call.1} parent=47 // pred_region
          %vm579 = vcmask 0
          %580 = vst.msk [vmem:[%s480] sm:$0x1] %vm579, 0.0
        $region68: #{tpu_custom_call.1} parent=47 // pred_fallthru
          _
        %v581 = vld [vmem:[%s480] sm:$0x1]
        %v582 = vmul.f32 %v573, %v573
        %v583 = vmul.f32 %v574, %v574
        %v584 = vadd.f32 %v582, %v583
        %585 = vadd.xlane.f32.xlu0 %v584
        %v586 = vpop.xlane.xlu0 %585
        %v587 = vrot.slane %v586, 4
        %v588 = vadd.f32 %v586, %v587
        %v589 = vrot.slane %v588, 2
        %v590 = vadd.f32 %v588, %v589
        %v591 = vrot.slane %v590, 1
        %v592 = vadd.f32 %v590, %v591
        %s593 = vtos %v592
        %v594 = vstv %s593
        %v595 = vadd.f32 %v581, %v594
        %vm596 = vcmask 0
        %597 = vst.msk [vmem:[%s480] sm:$0x1] %vm596, %v595
        %s598 = sand.u32 %s227, 1
        %s599 = scalar_lea.sflag [#allocation4], %s598
        %s600 = sand.u32 %s227, 1
        %s601 = smul.addr %s600, 16
        %s602 = scalar_lea.vmem [#allocation10], %s601
        %p603 = scmp.lt.s32.totalorder %s34, 1
        %s604 = scalar_select %p603, %s34, 1
        %s605 = scalar_lea.vmem %s8, %s604
        // Predicated region
        $region69: #{tpu_custom_call.1} parent=47 // pred_check
          %p606 = pneg %p237
        $region70: #{tpu_custom_call.1} parent=47 // pred_check_branch
          %608 = sbr.rel (%p606) target = $region72
        $region71: #{tpu_custom_call.1} parent=47 // pred_region
          %s609 = smul.u32 2, %s35
          %s611 = ssub.s32 256, 256
          %612 = vsyncadd %s599, %s611
          %s613 = smul.addr %s34, 4
          %s614 = sadd.s32 %s609, %s613
          %s615 = smul.addr %s614, 128
          %s616 = scalar_lea.hbm %s7, %s615
          %s618 = sshll.u32 %s602, 4
          %s619 = int_to_ptr.vmem [resolvable:$true] %s618
          %621 = dma.vmem_to_hbm [thread:$0]  %s619, 256, %s616, %s599
        $region72: #{tpu_custom_call.1} parent=47 // pred_fallthru
          _
        // Predicated region
        $region73: #{tpu_custom_call.1} parent=47 // pred_check
          %p622 = pneg %p263
        $region74: #{tpu_custom_call.1} parent=47 // pred_check_branch
          %624 = sbr.rel (%p622) target = $region76
        $region75: #{tpu_custom_call.1} parent=47 // pred_region
          _
        $region76: #{tpu_custom_call.1} parent=47 // pred_fallthru
          _
      $region48: #{tpu_custom_call.1} parent=5 // pred_fallthru
        _
      %p625 = scmp.le.s32.totalorder 2, %s25
      // Predicated region
      $region77: #{tpu_custom_call.1} parent=5 // pred_check
        %p626 = pneg %p625
      $region78: #{tpu_custom_call.1} parent=5 // pred_check_branch
        %628 = sbr.rel (%p626) target = $region80
      $region79: #{tpu_custom_call.1} parent=5 // pred_region
        %s629 = ssub.s32 %s25, 2
        // Predicated region
        $region81: #{tpu_custom_call.1} parent=79 // pred_check
          %p630 = pneg %p243
        $region82: #{tpu_custom_call.1} parent=79 // pred_check_branch
          %632 = sbr.rel (%p630) target = $region84
        $region83: #{tpu_custom_call.1} parent=79 // pred_region
          %s633 = sand.u32 %s228, 1
          %s634 = scalar_lea.sflag [#allocation4], %s633
          %s635 = sand.u32 %s228, 1
          %s636 = smul.addr %s635, 16
          %s637 = scalar_lea.vmem [#allocation10], %s636
          %638 = dma.done %s634, 256
        $region84: #{tpu_custom_call.1} parent=79 // pred_fallthru
          _
        // Predicated region
        $region85: #{tpu_custom_call.1} parent=79 // pred_check
          %p639 = pneg %p269
        $region86: #{tpu_custom_call.1} parent=79 // pred_check_branch
          %641 = sbr.rel (%p639) target = $region88
        $region87: #{tpu_custom_call.1} parent=79 // pred_region
          %p642 = scmp.lt.s32.totalorder %s36, 1
          %s643 = scalar_select %p642, %s36, 1
          %s644 = scalar_lea.vmem %s8, %s643
        $region88: #{tpu_custom_call.1} parent=79 // pred_fallthru
          _
      $region80: #{tpu_custom_call.1} parent=5 // pred_fallthru
        _
    $region6: #{tpu_custom_call.1} parent=1 // loop_footer
      %s29 = sadd.s32 1, %s25
    $region7: #{tpu_custom_call.1} parent=1 // loop_footer_branch
      %24 = sbr.rel target = $region3
    $region8: #{tpu_custom_call.1} parent=1 // loop_exit
      _
    %645 = vsyncpa [#allocation3], 1
    %s646 = scalar_lea.sflag [#allocation3], 1
    %647 = vsyncpa %s646, 1
    %648 = vsyncpa [#allocation8], 1
    %s649 = scalar_lea.sflag [#allocation8], 1
    %650 = vsyncpa %s649, 1
    %651 = vsyncpa [#allocation4], 1
    %s652 = scalar_lea.sflag [#allocation4], 1
    %653 = vsyncpa %s652, 1
    %654 = vsyncpa [#allocation5], 1
    %s655 = scalar_lea.sflag [#allocation5], 1
    %656 = vsyncpa %s655, 1

</llo_original>
